<compile_context>
chip_gen: v5e
topology: v5e:2x2
jax: 0.10.0
libtpu: 0.0.40
codegen_flags: <defaults>
</compile_context>

<pallas_src>
import functools

import jax
import jax.numpy as jnp
from jax import lax
from jax.experimental import pallas as pl
from jax.experimental.pallas import tpu as pltpu

_LANE = 128
_NUM_STATS = 8


def _round_up(x, m):
    return ((x + m - 1) // m) * m


def _level_kernel(pred_ref, gt_ref, ce_ref, neg_ref, part_ref, *, k, m_valid, tile_r):
    """One pixel-row tile of a pyramid level.

    pred_ref : (4 + 2k, TILE_R, 128) f32   [tr_l0, tr_l1, tcl_l0, tcl_l1, x_pred(k), y_pred(k)]
    gt_ref   : (3 + 2k, TILE_R, 128) bf16  [tr_mask, tcl_mask, train_mask, x_map(k), y_map(k)]
    ce_ref   : (TILE_R, 128) f32 out       per-pixel CE(tr_pred, tr_mask) (for OHEM top-k)
    neg_ref  : (TILE_R, 128) f32 out       OHEM negative mask (0/1)
    part_ref : (8, 128)      f32 out       per-tile partial sums (sublane-reduced)
    """
    t = pl.program_id(0)
    pred = pred_ref[...]
    gt = gt_ref[...].astype(jnp.float32)

    tr_l0, tr_l1 = pred[0], pred[1]
    tcl_l0, tcl_l1 = pred[2], pred[3]
    x_pred = pred[4:4 + k]
    y_pred = pred[4 + k:4 + 2 * k]
    tr_mask = gt[0]
    tcl_mask = gt[1]
    train_mask = gt[2]
    x_map = gt[3:3 + k]
    y_map = gt[3 + k:3 + 2 * k]

    # Validity mask for pixel-axis padding, derived from static M (no HBM cost).
    row = lax.broadcasted_iota(jnp.int32, (tile_r, _LANE), 0) + t * tile_r
    lane = lax.broadcasted_iota(jnp.int32, (tile_r, _LANE), 1)
    valid = (row * _LANE + lane < m_valid).astype(jnp.float32)

    def ce2(l0, l1, tgt):
        # 2-class CE = softplus(l_other - l_picked), numerically stable form.
        picked = jnp.where(tgt > 0.5, l1, l0)
        other = jnp.where(tgt > 0.5, l0, l1)
        d = other - picked
        return jnp.maximum(d, 0.0) + jnp.log1p(jnp.exp(-jnp.abs(d)))

    ce_tr = ce2(tr_l0, tr_l1, tr_mask)       # (TILE_R, 128)
    ce_tcl = ce2(tcl_l0, tcl_l1, tcl_mask)   # (TILE_R, 128)

    pos = tr_mask * train_mask               # tr_train_mask (padding has train_mask == 0)
    neg = (1.0 - tr_mask) * train_mask       # OHEM negatives
    tr_neg_mask = (1.0 - pos) * valid        # tcl "negative" set (matches reference: 1 - tr_train_mask)

    def smooth_l1(a, b):
        d = jnp.abs(a - b)
        return jnp.where(d < 1.0, 0.5 * d * d, d - 0.5)

    weight_pos = (tr_mask + tcl_mask) * 0.5 * pos
    sl1_x = jnp.sum(smooth_l1(x_map, x_pred), axis=0)   # (TILE_R, 128), VPU adds over k
    sl1_y = jnp.sum(smooth_l1(y_map, y_pred), axis=0)

    ce_ref[...] = ce_tr
    neg_ref[...] = neg

    def rsum(x):                             # sublane reduce -> (1, 128)
        return jnp.sum(x, axis=0, keepdims=True)

    part_ref[0:1, :] = rsum(ce_tr * pos)            # 0: OHEM positive CE sum
    part_ref[1:2, :] = rsum(pos)                    # 1: n_pos
    part_ref[2:3, :] = rsum(neg)                    # 2: n_neg available
    part_ref[3:4, :] = rsum(ce_tcl * pos)           # 3: tcl positive CE sum
    part_ref[4:5, :] = rsum(ce_tcl * tr_neg_mask)   # 4: tcl negative CE sum
    part_ref[5:6, :] = rsum(tr_neg_mask)            # 5: tcl negative count
    part_ref[6:7, :] = rsum(sl1_x * weight_pos)     # 6: weighted smooth-L1 x sum
    part_ref[7:8, :] = rsum(sl1_y * weight_pos)     # 7: weighted smooth-L1 y sum


def _pack_channels_first(x):
    """NCHW -> (C, N*H*W) with a single transpose (pixel order is irrelevant here)."""
    n, c, h, w = x.shape
    return jnp.swapaxes(x.reshape(n, c, h * w), 0, 1).reshape(c, n * h * w)


@functools.partial(jax.jit,
                   static_argnames=("k", "ohem_ratio", "ohem_topk_cap", "tile_r_max"))
def _level_losses(cls_pred, reg_pred, gt, *, k, ohem_ratio,
                  ohem_topk_cap=4096, tile_r_max=64):
    n, _, h, w = cls_pred.shape
    m = n * h * w

    pred_cm = jnp.concatenate(
        [_pack_channels_first(cls_pred), _pack_channels_first(reg_pred)],
        axis=0).astype(jnp.float32)                        # (4 + 2k, M) f32
    gt_cm = _pack_channels_first(gt).astype(jnp.bfloat16)  # (3 + 2k, M) bf16 over HBM

    r_need = _round_up(m, _LANE) // _LANE
    tile_r = min(tile_r_max, _round_up(max(r_need, 1), 8))
    r_pad = _round_up(r_need, tile_r)
    m_pad = r_pad * _LANE
    num_tiles = r_pad // tile_r

    pred_3d = jnp.pad(pred_cm, ((0, 0), (0, m_pad - m))).reshape(4 + 2 * k, r_pad, _LANE)
    gt_3d = jnp.pad(gt_cm, ((0, 0), (0, m_pad - m))).reshape(3 + 2 * k, r_pad, _LANE)

    kernel = functools.partial(_level_kernel, k=k, m_valid=m, tile_r=tile_r)
    ce, neg, parts = pl.pallas_call(
        kernel,
        grid=(num_tiles,),
        in_specs=[
            pl.BlockSpec((4 + 2 * k, tile_r, _LANE), lambda t: (0, t, 0)),
            pl.BlockSpec((3 + 2 * k, tile_r, _LANE), lambda t: (0, t, 0)),
        ],
        out_specs=(
            pl.BlockSpec((tile_r, _LANE), lambda t: (t, 0)),
            pl.BlockSpec((tile_r, _LANE), lambda t: (t, 0)),
            pl.BlockSpec((_NUM_STATS, _LANE), lambda t: (t, 0)),
        ),
        out_shape=(
            jax.ShapeDtypeStruct((r_pad, _LANE), jnp.float32),
            jax.ShapeDtypeStruct((r_pad, _LANE), jnp.float32),
            jax.ShapeDtypeStruct((num_tiles * _NUM_STATS, _LANE), jnp.float32),
        ),
        compiler_params=pltpu.CompilerParams(dimension_semantics=("parallel",)),
    )(pred_3d, gt_3d)

    stats = jnp.sum(parts.reshape(num_tiles, _NUM_STATS, _LANE), axis=(0, 2))  # (8,)
    pos_ce_sum, n_pos, n_neg_avail = stats[0], stats[1], stats[2]
    tclpos_sum, tclneg_sum, tclneg_cnt = stats[3], stats[4], stats[5]
    regx_sum, regy_sum = stats[6], stats[7]

    # ---------------- OHEM (top-k of negative CE, JAX glue) -------------------
    ce_flat = ce.reshape(-1)
    neg_flat = neg.reshape(-1)
    has_pos = n_pos > 0
    loss_pos = jnp.where(has_pos, pos_ce_sum, 0.0)
    n_neg = jnp.where(
        has_pos,
        jnp.minimum(n_neg_avail, jnp.floor(ohem_ratio * n_pos)),
        jnp.float32(100.0),
    )
    n_take = jnp.minimum(n_neg, n_neg_avail)

    cap = int(min(m_pad, max(int(ohem_topk_cap), 1)))
    # TODO(synk): exact only while the selected negative count <= cap; raise
    # ohem_topk_cap (up to M) if OHEM routinely selects more negatives.
    neg_vals = jnp.where(neg_flat > 0.5, ce_flat, jnp.float32(-1.0))  # CE >= 0 -> finite sentinel
    top_vals, _ = jax.lax.top_k(neg_vals, cap)
    n_take_i = jnp.minimum(n_take, jnp.float32(cap)).astype(jnp.int32)
    take = jnp.arange(cap, dtype=jnp.int32) < n_take_i
    loss_neg_sum = jnp.sum(jnp.where(take, top_vals, 0.0))
    loss_tr = (loss_pos + loss_neg_sum) / (n_pos + n_neg)

    # ---------------- TCL CE + weighted smooth-L1 means -----------------------
    loss_tcl = jnp.where(
        has_pos,
        tclpos_sum / jnp.maximum(n_pos, 1.0)
        + 0.5 * tclneg_sum / jnp.maximum(tclneg_cnt, 1.0),
        0.0,
    )
    denom = jnp.maximum(n_pos * jnp.float32(k), 1.0)
    loss_reg_x = jnp.where(has_pos, regx_sum / denom, 0.0)
    loss_reg_y = jnp.where(has_pos, regy_sum / denom, 0.0)
    return loss_tr, loss_tcl, loss_reg_x, loss_reg_y


class BSLossTBNew:
    """JAX/Pallas port of mmocr BSLoss_tb_new forward pass (no learnable params)."""

    def __init__(self, bs_degree, cp_num, ohem_ratio=3.0):
        self.bs_degree = bs_degree   # only used by cal_contour (not part of forward)
        self.cp_num = cp_num
        self.ohem_ratio = float(ohem_ratio)

    # TODO(synk): cal_contour (geomdl B-Spline evaluation) is not part of the
    # forward loss computation and is not reproduced here.
    def __call__(self, preds, _, p3_maps, p4_maps, p5_maps):
        assert isinstance(preds, list)
        k = self.cp_num * 2
        gts = [jnp.stack(maps).astype(jnp.float32)
               for maps in (p3_maps, p4_maps, p5_maps)]
        loss_tr = jnp.float32(0.0)
        loss_tcl = jnp.float32(0.0)
        loss_reg_x = jnp.float32(0.0)
        loss_reg_y = jnp.float32(0.0)
        for (cls_p, reg_p), gt in zip(preds, gts):
            ltr, ltcl, lrx, lry = _level_losses(
                cls_p, reg_p, gt, k=k, ohem_ratio=self.ohem_ratio)
            loss_tr = loss_tr + ltr
            loss_tcl = loss_tcl + ltcl
            loss_reg_x = loss_reg_x + lrx
            loss_reg_y = loss_reg_y + lry
        return dict(loss_text=loss_tr, loss_center=loss_tcl,
                    loss_reg_x=loss_reg_x, loss_reg_y=loss_reg_y)


if __name__ == "__main__":
    key = jax.random.PRNGKey(0)
    bs_degree, cp_num = 3, 4
    k = cp_num * 2                      # 8 control-point coordinates per axis
    N = 2
    level_sizes = [(16, 16), (8, 8), (4, 4)]

    preds = []
    gt_lists = [[], [], []]
    for li, (h, w) in enumerate(level_sizes):
        key, k_cls, k_reg, k_gt = jax.random.split(key, 4)
        cls_p = jax.random.normal(k_cls, (N, 4, h, w), jnp.float32)
        reg_p = jax.random.normal(k_reg, (N, 2 * k, h, w), jnp.float32)
        preds.append([cls_p, reg_p])
        for b in range(N):
            kb = jax.random.fold_in(k_gt, b)
            kb1, kb2, kb3, kb4, kb5 = jax.random.split(kb, 5)
            tr = (jax.random.uniform(kb1, (1, h, w)) < 0.3).astype(jnp.float32)
            tcl = (jax.random.uniform(kb2, (1, h, w)) < 0.2).astype(jnp.float32)
            train = (jax.random.uniform(kb3, (1, h, w)) < 0.8).astype(jnp.float32)
            xm = jax.random.normal(kb4, (k, h, w), jnp.float32)
            ym = jax.random.normal(kb5, (k, h, w), jnp.float32)
            gt_lists[li].append(jnp.concatenate([tr, tcl, train, xm, ym], axis=0))

    loss_fn = BSLossTBNew(bs_degree, cp_num, ohem_ratio=3.0)
    out = loss_fn(preds, None, gt_lists[0], gt_lists[1], gt_lists[2])
    jax.block_until_ready(out)
    print("KERNEL_OK")
</pallas_src>

<mosaic_0001>
module attributes {stable_mosaic.version = 11 : i64} {
  func.func @_level_kernel(%arg0: i32, %arg1: memref<20x8x128xf32, #tpu.memory_space<vmem>>, %arg2: memref<19x8x128xbf16, #tpu.memory_space<vmem>>, %arg3: memref<8x128xf32, #tpu.memory_space<vmem>>, %arg4: memref<8x128xf32, #tpu.memory_space<vmem>>, %arg5: memref<8x128xf32, #tpu.memory_space<vmem>>) attributes {dimension_semantics = [#tpu.dimension_semantics<parallel>], iteration_bounds = array<i64: 1>, scalar_prefetch = 0 : i64, scratch_operands = 0 : i64, tpu.core_type = #tpu.core_type<tc>, window_params = [{transform_indices = @transform_0, window_bounds = array<i64: 20, 8, 128>}, {transform_indices = @transform_1, window_bounds = array<i64: 19, 8, 128>}, {transform_indices = @transform_2, window_bounds = array<i64: 8, 128>}, {transform_indices = @transform_3, window_bounds = array<i64: 8, 128>}, {transform_indices = @transform_4, window_bounds = array<i64: 8, 128>}]} {
    %c0 = arith.constant 0 : index
    %c0_0 = arith.constant 0 : index
    %c0_1 = arith.constant 0 : index
    %0 = vector.load %arg1[%c0, %c0_0, %c0_1] : memref<20x8x128xf32, #tpu.memory_space<vmem>>, vector<20x8x128xf32>
    %c0_2 = arith.constant 0 : index
    %c0_3 = arith.constant 0 : index
    %c0_4 = arith.constant 0 : index
    %1 = vector.load %arg2[%c0_2, %c0_3, %c0_4] : memref<19x8x128xbf16, #tpu.memory_space<vmem>>, vector<19x8x128xbf16>
    %2 = arith.extf %1 : vector<19x8x128xbf16> to vector<19x8x128xf32>
    %3 = vector.extract_strided_slice %0 {offsets = [0, 0, 0], sizes = [1, 8, 128], strides = [1, 1, 1]} : vector<20x8x128xf32> to vector<1x8x128xf32>
    %4 = vector.shape_cast %3 : vector<1x8x128xf32> to vector<8x128xf32>
    %5 = vector.extract_strided_slice %0 {offsets = [1, 0, 0], sizes = [1, 8, 128], strides = [1, 1, 1]} : vector<20x8x128xf32> to vector<1x8x128xf32>
    %6 = vector.shape_cast %5 : vector<1x8x128xf32> to vector<8x128xf32>
    %7 = vector.extract_strided_slice %0 {offsets = [2, 0, 0], sizes = [1, 8, 128], strides = [1, 1, 1]} : vector<20x8x128xf32> to vector<1x8x128xf32>
    %8 = vector.shape_cast %7 : vector<1x8x128xf32> to vector<8x128xf32>
    %9 = vector.extract_strided_slice %0 {offsets = [3, 0, 0], sizes = [1, 8, 128], strides = [1, 1, 1]} : vector<20x8x128xf32> to vector<1x8x128xf32>
    %10 = vector.shape_cast %9 : vector<1x8x128xf32> to vector<8x128xf32>
    %11 = vector.extract_strided_slice %0 {offsets = [4, 0, 0], sizes = [8, 8, 128], strides = [1, 1, 1]} : vector<20x8x128xf32> to vector<8x8x128xf32>
    %12 = vector.extract_strided_slice %0 {offsets = [12, 0, 0], sizes = [8, 8, 128], strides = [1, 1, 1]} : vector<20x8x128xf32> to vector<8x8x128xf32>
    %13 = vector.extract_strided_slice %2 {offsets = [0, 0, 0], sizes = [1, 8, 128], strides = [1, 1, 1]} : vector<19x8x128xf32> to vector<1x8x128xf32>
    %14 = vector.shape_cast %13 : vector<1x8x128xf32> to vector<8x128xf32>
    %15 = vector.extract_strided_slice %2 {offsets = [1, 0, 0], sizes = [1, 8, 128], strides = [1, 1, 1]} : vector<19x8x128xf32> to vector<1x8x128xf32>
    %16 = vector.shape_cast %15 : vector<1x8x128xf32> to vector<8x128xf32>
    %17 = vector.extract_strided_slice %2 {offsets = [2, 0, 0], sizes = [1, 8, 128], strides = [1, 1, 1]} : vector<19x8x128xf32> to vector<1x8x128xf32>
    %18 = vector.shape_cast %17 : vector<1x8x128xf32> to vector<8x128xf32>
    %19 = vector.extract_strided_slice %2 {offsets = [3, 0, 0], sizes = [8, 8, 128], strides = [1, 1, 1]} : vector<19x8x128xf32> to vector<8x8x128xf32>
    %20 = vector.extract_strided_slice %2 {offsets = [11, 0, 0], sizes = [8, 8, 128], strides = [1, 1, 1]} : vector<19x8x128xf32> to vector<8x8x128xf32>
    %21 = tpu.iota {dimensions = array<i32: 0>} : vector<8x128xi32>
    %c8_i32 = arith.constant 8 : i32
    %22 = arith.muli %arg0, %c8_i32 : i32
    %23 = vector.broadcast %22 : i32 to vector<8x128xi32>
    %24 = arith.addi %21, %23 : vector<8x128xi32>
    %25 = tpu.iota {dimensions = array<i32: 1>} : vector<8x128xi32>
    %c128_i32 = arith.constant 128 : i32
    %26 = vector.broadcast %c128_i32 : i32 to vector<8x128xi32>
    %27 = arith.muli %24, %26 : vector<8x128xi32>
    %28 = arith.addi %27, %25 : vector<8x128xi32>
    %c512_i32 = arith.constant 512 : i32
    %29 = vector.broadcast %c512_i32 : i32 to vector<8x128xi32>
    %30 = arith.cmpi slt, %28, %29 : vector<8x128xi32>
    %31 = arith.extui %30 : vector<8x128xi1> to vector<8x128xi32>
    %32 = arith.sitofp %31 : vector<8x128xi32> to vector<8x128xf32>
    %cst = arith.constant 5.000000e-01 : f32
    %33 = vector.broadcast %cst : f32 to vector<8x128xf32>
    %34 = arith.cmpf ogt, %14, %33 : vector<8x128xf32>
    %35 = arith.select %34, %6, %4 : vector<8x128xi1>, vector<8x128xf32>
    %cst_5 = arith.constant 5.000000e-01 : f32
    %36 = vector.broadcast %cst_5 : f32 to vector<8x128xf32>
    %37 = arith.cmpf ogt, %14, %36 : vector<8x128xf32>
    %38 = arith.select %37, %4, %6 : vector<8x128xi1>, vector<8x128xf32>
    %39 = arith.subf %38, %35 : vector<8x128xf32>
    %cst_6 = arith.constant 0.000000e+00 : f32
    %40 = vector.broadcast %cst_6 : f32 to vector<8x128xf32>
    %41 = arith.maximumf %39, %40 : vector<8x128xf32>
    %42 = math.absf %39 : vector<8x128xf32>
    %cst_7 = arith.constant 0.000000e+00 : f32
    %43 = vector.broadcast %cst_7 : f32 to vector<8x128xf32>
    %44 = arith.subf %43, %42 : vector<8x128xf32>
    %45 = math.exp %44 : vector<8x128xf32>
    %46 = math.log1p %45 : vector<8x128xf32>
    %47 = arith.addf %41, %46 : vector<8x128xf32>
    %cst_8 = arith.constant 5.000000e-01 : f32
    %48 = vector.broadcast %cst_8 : f32 to vector<8x128xf32>
    %49 = arith.cmpf ogt, %16, %48 : vector<8x128xf32>
    %50 = arith.select %49, %10, %8 : vector<8x128xi1>, vector<8x128xf32>
    %cst_9 = arith.constant 5.000000e-01 : f32
    %51 = vector.broadcast %cst_9 : f32 to vector<8x128xf32>
    %52 = arith.cmpf ogt, %16, %51 : vector<8x128xf32>
    %53 = arith.select %52, %8, %10 : vector<8x128xi1>, vector<8x128xf32>
    %54 = arith.subf %53, %50 : vector<8x128xf32>
    %cst_10 = arith.constant 0.000000e+00 : f32
    %55 = vector.broadcast %cst_10 : f32 to vector<8x128xf32>
    %56 = arith.maximumf %54, %55 : vector<8x128xf32>
    %57 = math.absf %54 : vector<8x128xf32>
    %cst_11 = arith.constant 0.000000e+00 : f32
    %58 = vector.broadcast %cst_11 : f32 to vector<8x128xf32>
    %59 = arith.subf %58, %57 : vector<8x128xf32>
    %60 = math.exp %59 : vector<8x128xf32>
    %61 = math.log1p %60 : vector<8x128xf32>
    %62 = arith.addf %56, %61 : vector<8x128xf32>
    %63 = arith.mulf %14, %18 : vector<8x128xf32>
    %cst_12 = arith.constant 1.000000e+00 : f32
    %64 = vector.broadcast %cst_12 : f32 to vector<8x128xf32>
    %65 = arith.subf %64, %14 : vector<8x128xf32>
    %66 = arith.mulf %65, %18 : vector<8x128xf32>
    %cst_13 = arith.constant 1.000000e+00 : f32
    %67 = vector.broadcast %cst_13 : f32 to vector<8x128xf32>
    %68 = arith.subf %67, %63 : vector<8x128xf32>
    %69 = arith.mulf %68, %32 : vector<8x128xf32>
    %70 = arith.addf %14, %16 : vector<8x128xf32>
    %cst_14 = arith.constant 5.000000e-01 : f32
    %71 = vector.broadcast %cst_14 : f32 to vector<8x128xf32>
    %72 = arith.mulf %70, %71 : vector<8x128xf32>
    %73 = arith.mulf %72, %63 : vector<8x128xf32>
    %74 = arith.subf %19, %11 : vector<8x8x128xf32>
    %75 = math.absf %74 : vector<8x8x128xf32>
    %cst_15 = arith.constant 1.000000e+00 : f32
    %76 = vector.broadcast %cst_15 : f32 to vector<8x8x128xf32>
    %77 = arith.cmpf olt, %75, %76 : vector<8x8x128xf32>
    %cst_16 = arith.constant 5.000000e-01 : f32
    %78 = vector.broadcast %cst_16 : f32 to vector<8x8x128xf32>
    %79 = arith.mulf %78, %75 : vector<8x8x128xf32>
    %80 = arith.mulf %79, %75 : vector<8x8x128xf32>
    %cst_17 = arith.constant 5.000000e-01 : f32
    %81 = vector.broadcast %cst_17 : f32 to vector<8x8x128xf32>
    %82 = arith.subf %75, %81 : vector<8x8x128xf32>
    %83 = arith.select %77, %80, %82 : vector<8x8x128xi1>, vector<8x8x128xf32>
    %cst_18 = arith.constant dense<0.000000e+00> : vector<8x128xf32>
    %84 = vector.multi_reduction <add>, %83, %cst_18 [0] : vector<8x8x128xf32> to vector<8x128xf32>
    %85 = arith.subf %20, %12 : vector<8x8x128xf32>
    %86 = math.absf %85 : vector<8x8x128xf32>
    %cst_19 = arith.constant 1.000000e+00 : f32
    %87 = vector.broadcast %cst_19 : f32 to vector<8x8x128xf32>
    %88 = arith.cmpf olt, %86, %87 : vector<8x8x128xf32>
    %cst_20 = arith.constant 5.000000e-01 : f32
    %89 = vector.broadcast %cst_20 : f32 to vector<8x8x128xf32>
    %90 = arith.mulf %89, %86 : vector<8x8x128xf32>
    %91 = arith.mulf %90, %86 : vector<8x8x128xf32>
    %cst_21 = arith.constant 5.000000e-01 : f32
    %92 = vector.broadcast %cst_21 : f32 to vector<8x8x128xf32>
    %93 = arith.subf %86, %92 : vector<8x8x128xf32>
    %94 = arith.select %88, %91, %93 : vector<8x8x128xi1>, vector<8x8x128xf32>
    %cst_22 = arith.constant dense<0.000000e+00> : vector<8x128xf32>
    %95 = vector.multi_reduction <add>, %94, %cst_22 [0] : vector<8x8x128xf32> to vector<8x128xf32>
    %c0_23 = arith.constant 0 : index
    %c0_24 = arith.constant 0 : index
    %96 = vector.load %arg3[%c0_23, %c0_24] : memref<8x128xf32, #tpu.memory_space<vmem>>, vector<8x128xf32>
    tpu.vector_store %arg3[%c0_23, %c0_24], %47 {strides = array<i32>} : memref<8x128xf32, #tpu.memory_space<vmem>>, vector<8x128xf32>,
    %c0_25 = arith.constant 0 : index
    %c0_26 = arith.constant 0 : index
    %97 = vector.load %arg4[%c0_25, %c0_26] : memref<8x128xf32, #tpu.memory_space<vmem>>, vector<8x128xf32>
    tpu.vector_store %arg4[%c0_25, %c0_26], %66 {strides = array<i32>} : memref<8x128xf32, #tpu.memory_space<vmem>>, vector<8x128xf32>,
    %98 = arith.mulf %47, %63 : vector<8x128xf32>
    %cst_27 = arith.constant dense<0.000000e+00> : vector<128xf32>
    %99 = vector.multi_reduction <add>, %98, %cst_27 [0] : vector<8x128xf32> to vector<128xf32>
    %100 = vector.shape_cast %99 : vector<128xf32> to vector<1x128xf32>
    %c0_28 = arith.constant 0 : index
    %c0_29 = arith.constant 0 : index
    %101 = vector.load %arg5[%c0_28, %c0_29] : memref<8x128xf32, #tpu.memory_space<vmem>>, vector<1x128xf32>
    tpu.vector_store %arg5[%c0_28, %c0_29], %100 {strides = array<i32>} : memref<8x128xf32, #tpu.memory_space<vmem>>, vector<1x128xf32>,
    %cst_30 = arith.constant dense<0.000000e+00> : vector<128xf32>
    %102 = vector.multi_reduction <add>, %63, %cst_30 [0] : vector<8x128xf32> to vector<128xf32>
    %103 = vector.shape_cast %102 : vector<128xf32> to vector<1x128xf32>
    %c1 = arith.constant 1 : index
    %c0_31 = arith.constant 0 : index
    %104 = vector.load %arg5[%c1, %c0_31] : memref<8x128xf32, #tpu.memory_space<vmem>>, vector<1x128xf32>
    tpu.vector_store %arg5[%c1, %c0_31], %103 {strides = array<i32>} : memref<8x128xf32, #tpu.memory_space<vmem>>, vector<1x128xf32>,
    %cst_32 = arith.constant dense<0.000000e+00> : vector<128xf32>
    %105 = vector.multi_reduction <add>, %66, %cst_32 [0] : vector<8x128xf32> to vector<128xf32>
    %106 = vector.shape_cast %105 : vector<128xf32> to vector<1x128xf32>
    %c2 = arith.constant 2 : index
    %c0_33 = arith.constant 0 : index
    %107 = vector.load %arg5[%c2, %c0_33] : memref<8x128xf32, #tpu.memory_space<vmem>>, vector<1x128xf32>
    tpu.vector_store %arg5[%c2, %c0_33], %106 {strides = array<i32>} : memref<8x128xf32, #tpu.memory_space<vmem>>, vector<1x128xf32>,
    %108 = arith.mulf %62, %63 : vector<8x128xf32>
    %cst_34 = arith.constant dense<0.000000e+00> : vector<128xf32>
    %109 = vector.multi_reduction <add>, %108, %cst_34 [0] : vector<8x128xf32> to vector<128xf32>
    %110 = vector.shape_cast %109 : vector<128xf32> to vector<1x128xf32>
    %c3 = arith.constant 3 : index
    %c0_35 = arith.constant 0 : index
    %111 = vector.load %arg5[%c3, %c0_35] : memref<8x128xf32, #tpu.memory_space<vmem>>, vector<1x128xf32>
    tpu.vector_store %arg5[%c3, %c0_35], %110 {strides = array<i32>} : memref<8x128xf32, #tpu.memory_space<vmem>>, vector<1x128xf32>,
    %112 = arith.mulf %62, %69 : vector<8x128xf32>
    %cst_36 = arith.constant dense<0.000000e+00> : vector<128xf32>
    %113 = vector.multi_reduction <add>, %112, %cst_36 [0] : vector<8x128xf32> to vector<128xf32>
    %114 = vector.shape_cast %113 : vector<128xf32> to vector<1x128xf32>
    %c4 = arith.constant 4 : index
    %c0_37 = arith.constant 0 : index
    %115 = vector.load %arg5[%c4, %c0_37] : memref<8x128xf32, #tpu.memory_space<vmem>>, vector<1x128xf32>
    tpu.vector_store %arg5[%c4, %c0_37], %114 {strides = array<i32>} : memref<8x128xf32, #tpu.memory_space<vmem>>, vector<1x128xf32>,
    %cst_38 = arith.constant dense<0.000000e+00> : vector<128xf32>
    %116 = vector.multi_reduction <add>, %69, %cst_38 [0] : vector<8x128xf32> to vector<128xf32>
    %117 = vector.shape_cast %116 : vector<128xf32> to vector<1x128xf32>
    %c5 = arith.constant 5 : index
    %c0_39 = arith.constant 0 : index
    %118 = vector.load %arg5[%c5, %c0_39] : memref<8x128xf32, #tpu.memory_space<vmem>>, vector<1x128xf32>
    tpu.vector_store %arg5[%c5, %c0_39], %117 {strides = array<i32>} : memref<8x128xf32, #tpu.memory_space<vmem>>, vector<1x128xf32>,
    %119 = arith.mulf %84, %73 : vector<8x128xf32>
    %cst_40 = arith.constant dense<0.000000e+00> : vector<128xf32>
    %120 = vector.multi_reduction <add>, %119, %cst_40 [0] : vector<8x128xf32> to vector<128xf32>
    %121 = vector.shape_cast %120 : vector<128xf32> to vector<1x128xf32>
    %c6 = arith.constant 6 : index
    %c0_41 = arith.constant 0 : index
    %122 = vector.load %arg5[%c6, %c0_41] : memref<8x128xf32, #tpu.memory_space<vmem>>, vector<1x128xf32>
    tpu.vector_store %arg5[%c6, %c0_41], %121 {strides = array<i32>} : memref<8x128xf32, #tpu.memory_space<vmem>>, vector<1x128xf32>,
    %123 = arith.mulf %95, %73 : vector<8x128xf32>
    %cst_42 = arith.constant dense<0.000000e+00> : vector<128xf32>
    %124 = vector.multi_reduction <add>, %123, %cst_42 [0] : vector<8x128xf32> to vector<128xf32>
    %125 = vector.shape_cast %124 : vector<128xf32> to vector<1x128xf32>
    %c7 = arith.constant 7 : index
    %c0_43 = arith.constant 0 : index
    %126 = vector.load %arg5[%c7, %c0_43] : memref<8x128xf32, #tpu.memory_space<vmem>>, vector<1x128xf32>
    tpu.vector_store %arg5[%c7, %c0_43], %125 {strides = array<i32>} : memref<8x128xf32, #tpu.memory_space<vmem>>, vector<1x128xf32>,
    return
  }
  func.func @transform_0(%arg0: i32) -> (i32, i32, i32) {
    %c0_i32 = arith.constant 0 : i32
    %c0_i32_0 = arith.constant 0 : i32
    %c0_i32_1 = arith.constant 0 : i32
    return %c0_i32, %arg0, %c0_i32_0 : i32, i32, i32
  }
  func.func @transform_1(%arg0: i32) -> (i32, i32, i32) {
    %c0_i32 = arith.constant 0 : i32
    %c0_i32_0 = arith.constant 0 : i32
    %c0_i32_1 = arith.constant 0 : i32
    return %c0_i32, %arg0, %c0_i32_0 : i32, i32, i32
  }
  func.func @transform_2(%arg0: i32) -> (i32, i32) {
    %c0_i32 = arith.constant 0 : i32
    %c0_i32_0 = arith.constant 0 : i32
    return %arg0, %c0_i32 : i32, i32
  }
  func.func @transform_3(%arg0: i32) -> (i32, i32) {
    %c0_i32 = arith.constant 0 : i32
    %c0_i32_0 = arith.constant 0 : i32
    return %arg0, %c0_i32 : i32, i32
  }
  func.func @transform_4(%arg0: i32) -> (i32, i32) {
    %c0_i32 = arith.constant 0 : i32
    %c0_i32_0 = arith.constant 0 : i32
    return %arg0, %c0_i32 : i32, i32
  }
}

</mosaic_0001>

<llo_original>
// kernel: _level_losses.1
$region0: #{_level_losses.1}
  #allocation0 [shape = 'u32[]', space=smem, size = 0x4, offset = 0x4, fixed_abs, tag = 'smem constant byte address 0x4 - core index']
  #allocation1 [shape = 'u32[72,128]{1,0:T(1,128)}', space=vmem, size = 0x9000, scoped, tag = 'internal scratch']
  %s0 = inlined_call_operand.vmem [shape: f32[20,8,128], index: 0, kind: input, shape index: {}]
  %s1 = inlined_call_operand.vmem [shape: bf16[19,8,128], index: 1, kind: input, shape index: {}]
  %s2 = inlined_call_operand.vmem [shape: f32[8,128], index: 2, kind: output, shape index: {0}]
  %s3 = inlined_call_operand.vmem [shape: f32[8,128], index: 3, kind: output, shape index: {1}]
  %s4 = inlined_call_operand.vmem [shape: f32[8,128], index: 4, kind: output, shape index: {2}]
  %5 = xla_tuple %s2, %s3, %s4
  %s6 = sld [smem:[#allocation0]]
  $region34: #{_level_losses.1} parent=0
    _
  %s8 = ssub.s32 1, %s6
  %s9 = scalar_select 0, %s8, %s6
  // Predicated region
  $region2: #{_level_losses.1} parent=0 // pred_check
    _
  $region3: #{_level_losses.1} parent=0 // pred_check_branch
    %11 = sbr.rel (0) target = $region5
  $region4: #{_level_losses.1} parent=0 // pred_region
    _
  $region5: #{_level_losses.1} parent=0 // pred_fallthru
    _
  // Predicated region
  $region6: #{_level_losses.1} parent=0 // pred_check
    _
  $region7: #{_level_losses.1} parent=0 // pred_check_branch
    %13 = sbr.rel (0) target = $region9
  $region8: #{_level_losses.1} parent=0 // pred_region
    _
  $region9: #{_level_losses.1} parent=0 // pred_fallthru
    _
  %v14 = vld [vmem:[%s0] sm:$0xff]
  %v15 = vld [vmem:[%s0 + $0x8] sm:$0xff]
  %v16 = vld [vmem:[%s0 + $0x10] sm:$0xff]
  %v17 = vld [vmem:[%s0 + $0x18] sm:$0xff]
  %v18 = vld [vmem:[%s0 + $0x20] sm:$0xff]
  %v19 = vld [vmem:[%s0 + $0x28] sm:$0xff]
  %v20 = vld [vmem:[%s0 + $0x30] sm:$0xff]
  %v21 = vld [vmem:[%s0 + $0x38] sm:$0xff]
  %v22 = vld [vmem:[%s0 + $0x40] sm:$0xff]
  %v23 = vld [vmem:[%s0 + $0x48] sm:$0xff]
  %v24 = vld [vmem:[%s0 + $0x50] sm:$0xff]
  %v25 = vld [vmem:[%s0 + $0x58] sm:$0xff]
  %v26 = vld [vmem:[%s0 + $0x60] sm:$0xff]
  %v27 = vld [vmem:[%s0 + $0x68] sm:$0xff]
  %v28 = vld [vmem:[%s0 + $0x70] sm:$0xff]
  %v29 = vld [vmem:[%s0 + $0x78] sm:$0xff]
  %v30 = vld [vmem:[%s0 + $0x80] sm:$0xff]
  %v31 = vld [vmem:[%s0 + $0x88] sm:$0xff]
  %v32 = vld [vmem:[%s0 + $0x90] sm:$0xff]
  %v33 = vld [vmem:[%s0 + $0x98] sm:$0xff]
  %v34 = vld [vmem:[%s1] sm:$0xf]
  %v35 = vld [vmem:[%s1 + $0x4] sm:$0xf]
  %v36 = vld [vmem:[%s1 + $0x8] sm:$0xf]
  %v37 = vld [vmem:[%s1 + $0xc] sm:$0xf]
  %v38 = vld [vmem:[%s1 + $0x10] sm:$0xf]
  %v39 = vld [vmem:[%s1 + $0x14] sm:$0xf]
  %v40 = vld [vmem:[%s1 + $0x18] sm:$0xf]
  %v41 = vld [vmem:[%s1 + $0x1c] sm:$0xf]
  %v42 = vld [vmem:[%s1 + $0x20] sm:$0xf]
  %v43 = vld [vmem:[%s1 + $0x24] sm:$0xf]
  %v44 = vld [vmem:[%s1 + $0x28] sm:$0xf]
  %v45 = vld [vmem:[%s1 + $0x2c] sm:$0xf]
  %v46 = vld [vmem:[%s1 + $0x30] sm:$0xf]
  %v47 = vld [vmem:[%s1 + $0x34] sm:$0xf]
  %v48 = vld [vmem:[%s1 + $0x38] sm:$0xf]
  %v49 = vld [vmem:[%s1 + $0x3c] sm:$0xf]
  %v50 = vld [vmem:[%s1 + $0x40] sm:$0xf]
  %v51 = vld [vmem:[%s1 + $0x44] sm:$0xf]
  %v52 = vld [vmem:[%s1 + $0x48] sm:$0xf]
  %v53 = vunpack.c.l.bf16 %v34
  %v54 = vunpack.c.l.bf16 %v35
  %v55 = vunpack.c.l.bf16 %v36
  %v56 = vunpack.c.l.bf16 %v37
  %v57 = vunpack.c.l.bf16 %v38
  %v58 = vunpack.c.l.bf16 %v39
  %v59 = vunpack.c.l.bf16 %v40
  %v60 = vunpack.c.l.bf16 %v41
  %v61 = vunpack.c.l.bf16 %v42
  %v62 = vunpack.c.l.bf16 %v43
  %v63 = vunpack.c.l.bf16 %v44
  %v64 = vunpack.c.l.bf16 %v45
  %v65 = vunpack.c.l.bf16 %v46
  %v66 = vunpack.c.l.bf16 %v47
  %v67 = vunpack.c.l.bf16 %v48
  %v68 = vunpack.c.l.bf16 %v49
  %v69 = vunpack.c.l.bf16 %v50
  %v70 = vunpack.c.l.bf16 %v51
  %v71 = vunpack.c.l.bf16 %v52
  %v72 = vlaneseq
  %v73 = vshrl.u32 %v72, 7
  %s74 = smul.u32 0, 8
  %v75 = vstv %s74
  %v76 = vadd.s32 %v73, %v75
  %v77 = vlaneseq
  %v78 = vand.u32 %v77, 127
  %v79 = vmul.u32 %v76, 128
  %v80 = vadd.s32 %v79, %v78
  %vm81 = vcmp.lt.s32.totalorder %v80, 512
  %v82 = vsel %vm81, 1, 0
  %v83 = vcvt.s32.f32 %v82
  %vm84 = vcmp.gt.f32.partialorder %v53, 0.5
  %v85 = vsel %vm84, %v15, %v14
  %v86 = vsel %vm84, %v14, %v15
  %v87 = vsub.f32 %v86, %v85
  %v88 = vmax.f32 %v87, 0.0
  %v89 = vand.u32 2147483647, %v87
  %v90 = vsub.f32 0.0, %v89
  %v91 = vmul.f32 %v90, 1.442695
  %v92 = vpow.pop %v91
  %v93 = vadd.f32 %v92, 1.0
  %v94 = vlog2.pop %v93
  %v95 = vmul.f32 %v94, 0.6931472
  %v96 = vmul.f32 -0.5, %v92
  %v97 = vadd.f32 %v96, 1.0
  %v98 = vmul.f32 %v97, %v92
  %v99 = vand.u32 2147483647, %v92
  %vm100 = vcmp.lt.f32.partialorder %v99, 0.0004427343
  %v101 = vsel %vm100, %v98, %v95
  %v102 = vadd.f32 %v88, %v101
  %vm103 = vcmp.gt.f32.partialorder %v54, 0.5
  %v104 = vsel %vm103, %v17, %v16
  %v105 = vsel %vm103, %v16, %v17
  %v106 = vsub.f32 %v105, %v104
  %v107 = vmax.f32 %v106, 0.0
  %v108 = vand.u32 2147483647, %v106
  %v109 = vsub.f32 0.0, %v108
  %v110 = vmul.f32 %v109, 1.442695
  %v111 = vpow.pop %v110
  %v112 = vadd.f32 %v111, 1.0
  %v113 = vlog2.pop %v112
  %v114 = vmul.f32 %v113, 0.6931472
  %v115 = vmul.f32 -0.5, %v111
  %v116 = vadd.f32 %v115, 1.0
  %v117 = vmul.f32 %v116, %v111
  %v118 = vand.u32 2147483647, %v111
  %vm119 = vcmp.lt.f32.partialorder %v118, 0.0004427343
  %v120 = vsel %vm119, %v117, %v114
  %v121 = vadd.f32 %v107, %v120
  %v122 = vmul.f32 %v53, %v55
  %v123 = vsub.f32 1.0, %v53
  %v124 = vmul.f32 %v123, %v55
  %v125 = vsub.f32 1.0, %v122
  %v126 = vmul.f32 %v125, %v83
  %v127 = vadd.f32 %v53, %v54
  %v128 = vmul.f32 %v127, 0.5
  %v129 = vmul.f32 %v128, %v122
  %v130 = vsub.f32 %v56, %v18
  %v131 = vsub.f32 %v57, %v19
  %v132 = vsub.f32 %v58, %v20
  %v133 = vsub.f32 %v59, %v21
  %v134 = vsub.f32 %v60, %v22
  %v135 = vsub.f32 %v61, %v23
  %v136 = vsub.f32 %v62, %v24
  %v137 = vsub.f32 %v63, %v25
  %v138 = vand.u32 2147483647, %v130
  %v139 = vand.u32 2147483647, %v131
  %v140 = vand.u32 2147483647, %v132
  %v141 = vand.u32 2147483647, %v133
  %v142 = vand.u32 2147483647, %v134
  %v143 = vand.u32 2147483647, %v135
  %v144 = vand.u32 2147483647, %v136
  %v145 = vand.u32 2147483647, %v137
  %vm146 = vcmp.lt.f32.partialorder %v138, 1.0
  %vm147 = vcmp.lt.f32.partialorder %v139, 1.0
  %vm148 = vcmp.lt.f32.partialorder %v140, 1.0
  %vm149 = vcmp.lt.f32.partialorder %v141, 1.0
  %vm150 = vcmp.lt.f32.partialorder %v142, 1.0
  %vm151 = vcmp.lt.f32.partialorder %v143, 1.0
  %vm152 = vcmp.lt.f32.partialorder %v144, 1.0
  %vm153 = vcmp.lt.f32.partialorder %v145, 1.0
  %v154 = vmul.f32 %v138, 0.5
  %v155 = vmul.f32 %v139, 0.5
  %v156 = vmul.f32 %v140, 0.5
  %v157 = vmul.f32 %v141, 0.5
  %v158 = vmul.f32 %v142, 0.5
  %v159 = vmul.f32 %v143, 0.5
  %v160 = vmul.f32 %v144, 0.5
  %v161 = vmul.f32 %v145, 0.5
  %v162 = vmul.f32 %v154, %v138
  %v163 = vmul.f32 %v155, %v139
  %v164 = vmul.f32 %v156, %v140
  %v165 = vmul.f32 %v157, %v141
  %v166 = vmul.f32 %v158, %v142
  %v167 = vmul.f32 %v159, %v143
  %v168 = vmul.f32 %v160, %v144
  %v169 = vmul.f32 %v161, %v145
  %v170 = vsub.f32 %v138, 0.5
  %v171 = vsub.f32 %v139, 0.5
  %v172 = vsub.f32 %v140, 0.5
  %v173 = vsub.f32 %v141, 0.5
  %v174 = vsub.f32 %v142, 0.5
  %v175 = vsub.f32 %v143, 0.5
  %v176 = vsub.f32 %v144, 0.5
  %v177 = vsub.f32 %v145, 0.5
  %v178 = vsel %vm146, %v162, %v170
  %v179 = vsel %vm147, %v163, %v171
  %v180 = vsel %vm148, %v164, %v172
  %v181 = vsel %vm149, %v165, %v173
  %v182 = vsel %vm150, %v166, %v174
  %v183 = vsel %vm151, %v167, %v175
  %v184 = vsel %vm152, %v168, %v176
  %v185 = vsel %vm153, %v169, %v177
  %v186 = vadd.f32 %v178, %v179
  %v187 = vadd.f32 %v186, %v180
  %v188 = vadd.f32 %v187, %v181
  %v189 = vadd.f32 %v188, %v182
  %v190 = vadd.f32 %v189, %v183
  %v191 = vadd.f32 %v190, %v184
  %v192 = vadd.f32 %v191, %v185
  %v193 = vsub.f32 %v64, %v26
  %v194 = vsub.f32 %v65, %v27
  %v195 = vsub.f32 %v66, %v28
  %v196 = vsub.f32 %v67, %v29
  %v197 = vsub.f32 %v68, %v30
  %v198 = vsub.f32 %v69, %v31
  %v199 = vsub.f32 %v70, %v32
  %v200 = vsub.f32 %v71, %v33
  %v201 = vand.u32 2147483647, %v193
  %v202 = vand.u32 2147483647, %v194
  %v203 = vand.u32 2147483647, %v195
  %v204 = vand.u32 2147483647, %v196
  %v205 = vand.u32 2147483647, %v197
  %v206 = vand.u32 2147483647, %v198
  %v207 = vand.u32 2147483647, %v199
  %v208 = vand.u32 2147483647, %v200
  %vm209 = vcmp.lt.f32.partialorder %v201, 1.0
  %vm210 = vcmp.lt.f32.partialorder %v202, 1.0
  %vm211 = vcmp.lt.f32.partialorder %v203, 1.0
  %vm212 = vcmp.lt.f32.partialorder %v204, 1.0
  %vm213 = vcmp.lt.f32.partialorder %v205, 1.0
  %vm214 = vcmp.lt.f32.partialorder %v206, 1.0
  %vm215 = vcmp.lt.f32.partialorder %v207, 1.0
  %vm216 = vcmp.lt.f32.partialorder %v208, 1.0
  %v217 = vmul.f32 %v201, 0.5
  %v218 = vmul.f32 %v202, 0.5
  %v219 = vmul.f32 %v203, 0.5
  %v220 = vmul.f32 %v204, 0.5
  %v221 = vmul.f32 %v205, 0.5
  %v222 = vmul.f32 %v206, 0.5
  %v223 = vmul.f32 %v207, 0.5
  %v224 = vmul.f32 %v208, 0.5
  %v225 = vmul.f32 %v217, %v201
  %v226 = vmul.f32 %v218, %v202
  %v227 = vmul.f32 %v219, %v203
  %v228 = vmul.f32 %v220, %v204
  %v229 = vmul.f32 %v221, %v205
  %v230 = vmul.f32 %v222, %v206
  %v231 = vmul.f32 %v223, %v207
  %v232 = vmul.f32 %v224, %v208
  %v233 = vsub.f32 %v201, 0.5
  %v234 = vsub.f32 %v202, 0.5
  %v235 = vsub.f32 %v203, 0.5
  %v236 = vsub.f32 %v204, 0.5
  %v237 = vsub.f32 %v205, 0.5
  %v238 = vsub.f32 %v206, 0.5
  %v239 = vsub.f32 %v207, 0.5
  %v240 = vsub.f32 %v208, 0.5
  %v241 = vsel %vm209, %v225, %v233
  %v242 = vsel %vm210, %v226, %v234
  %v243 = vsel %vm211, %v227, %v235
  %v244 = vsel %vm212, %v228, %v236
  %v245 = vsel %vm213, %v229, %v237
  %v246 = vsel %vm214, %v230, %v238
  %v247 = vsel %vm215, %v231, %v239
  %v248 = vsel %vm216, %v232, %v240
  %v249 = vadd.f32 %v241, %v242
  %v250 = vadd.f32 %v249, %v243
  %v251 = vadd.f32 %v250, %v244
  %v252 = vadd.f32 %v251, %v245
  %v253 = vadd.f32 %v252, %v246
  %v254 = vadd.f32 %v253, %v247
  %v255 = vadd.f32 %v254, %v248
  %256 = vst [vmem:[%s2] sm:$0xff] %v102
  %257 = vst [vmem:[%s3] sm:$0xff] %v124
  %v258 = vmul.f32 %v102, %v122
  %v259 = vrot.slane %v258, 4
  %v260 = vadd.f32 %v258, %v259
  %v261 = vrot.slane %v260, 2
  %v262 = vadd.f32 %v260, %v261
  %v263 = vrot.slane %v262, 1
  %v264 = vadd.f32 %v262, %v263
  %265 = vst [vmem:[%s4] sm:$0x1] %v264
  %v266 = vrot.slane %v122, 4
  %v267 = vadd.f32 %v122, %v266
  %v268 = vrot.slane %v267, 2
  %v269 = vadd.f32 %v267, %v268
  %v270 = vrot.slane %v269, 1
  %v271 = vadd.f32 %v269, %v270
  %272 = vst [vmem:[%s4 + $0x1] sm:$0x1] %v271
  %v273 = vrot.slane %v124, 4
  %v274 = vadd.f32 %v124, %v273
  %v275 = vrot.slane %v274, 2
  %v276 = vadd.f32 %v274, %v275
  %v277 = vrot.slane %v276, 1
  %v278 = vadd.f32 %v276, %v277
  %279 = vst [vmem:[%s4 + $0x2] sm:$0x1] %v278
  %v280 = vmul.f32 %v121, %v122
  %v281 = vrot.slane %v280, 4
  %v282 = vadd.f32 %v280, %v281
  %v283 = vrot.slane %v282, 2
  %v284 = vadd.f32 %v282, %v283
  %v285 = vrot.slane %v284, 1
  %v286 = vadd.f32 %v284, %v285
  %287 = vst [vmem:[%s4 + $0x3] sm:$0x1] %v286
  %v288 = vmul.f32 %v121, %v126
  %v289 = vrot.slane %v288, 4
  %v290 = vadd.f32 %v288, %v289
  %v291 = vrot.slane %v290, 2
  %v292 = vadd.f32 %v290, %v291
  %v293 = vrot.slane %v292, 1
  %v294 = vadd.f32 %v292, %v293
  %295 = vst [vmem:[%s4 + $0x4] sm:$0x1] %v294
  %v296 = vrot.slane %v126, 4
  %v297 = vadd.f32 %v126, %v296
  %v298 = vrot.slane %v297, 2
  %v299 = vadd.f32 %v297, %v298
  %v300 = vrot.slane %v299, 1
  %v301 = vadd.f32 %v299, %v300
  %302 = vst [vmem:[%s4 + $0x5] sm:$0x1] %v301
  %v303 = vmul.f32 %v192, %v129
  %v304 = vrot.slane %v303, 4
  %v305 = vadd.f32 %v303, %v304
  %v306 = vrot.slane %v305, 2
  %v307 = vadd.f32 %v305, %v306
  %v308 = vrot.slane %v307, 1
  %v309 = vadd.f32 %v307, %v308
  %310 = vst [vmem:[%s4 + $0x6] sm:$0x1] %v309
  %v311 = vmul.f32 %v255, %v129
  %v312 = vrot.slane %v311, 4
  %v313 = vadd.f32 %v311, %v312
  %v314 = vrot.slane %v313, 2
  %v315 = vadd.f32 %v313, %v314
  %v316 = vrot.slane %v315, 1
  %v317 = vadd.f32 %v315, %v316
  %318 = vst [vmem:[%s4 + $0x7] sm:$0x1] %v317
  // Predicated region
  $region10: #{_level_losses.1} parent=0 // pred_check
    _
  $region11: #{_level_losses.1} parent=0 // pred_check_branch
    %320 = sbr.rel (0) target = $region13
  $region12: #{_level_losses.1} parent=0 // pred_region
    _
  $region13: #{_level_losses.1} parent=0 // pred_fallthru
    _
  // Predicated region
  $region14: #{_level_losses.1} parent=0 // pred_check
    _
  $region15: #{_level_losses.1} parent=0 // pred_check_branch
    %322 = sbr.rel (0) target = $region17
  $region16: #{_level_losses.1} parent=0 // pred_region
    _
  $region17: #{_level_losses.1} parent=0 // pred_fallthru
    _
  // Predicated region
  $region18: #{_level_losses.1} parent=0 // pred_check
    _
  $region19: #{_level_losses.1} parent=0 // pred_check_branch
    %324 = sbr.rel (0) target = $region21
  $region20: #{_level_losses.1} parent=0 // pred_region
    _
  $region21: #{_level_losses.1} parent=0 // pred_fallthru
    _
  // Predicated region
  $region22: #{_level_losses.1} parent=0 // pred_check
    _
  $region23: #{_level_losses.1} parent=0 // pred_check_branch
    %326 = sbr.rel (0) target = $region25
  $region24: #{_level_losses.1} parent=0 // pred_region
    _
  $region25: #{_level_losses.1} parent=0 // pred_fallthru
    _
  // Predicated region
  $region26: #{_level_losses.1} parent=0 // pred_check
    _
  $region27: #{_level_losses.1} parent=0 // pred_check_branch
    %328 = sbr.rel (0) target = $region29
  $region28: #{_level_losses.1} parent=0 // pred_region
    _
  $region29: #{_level_losses.1} parent=0 // pred_fallthru
    _
  // Predicated region
  $region30: #{_level_losses.1} parent=0 // pred_check
    _
  $region31: #{_level_losses.1} parent=0 // pred_check_branch
    %330 = sbr.rel (0) target = $region33
  $region32: #{_level_losses.1} parent=0 // pred_region
    _
  $region33: #{_level_losses.1} parent=0 // pred_fallthru
    _

</llo_original>
